<compile_context>
chip_gen: v7x
topology: tpu7x:2x2x1
jax: 0.10.0
libtpu: 0.0.40
codegen_flags: <defaults>
</compile_context>

<pallas_src>
import functools

import jax
import jax.numpy as jnp
from jax.experimental import pallas as pl
from jax.experimental.pallas import tpu as pltpu


def _grad3d_itv_kernel(x_ref, o_ref, acc_ref, prev_ref, mask_ref,
                       *, block_d, depth, width, hw, ragged):
    """One grid step = one D-block of one (batch*channel) volume.

    x_ref    : (1, block_d, H*W) native dtype -- current D-block.
    o_ref    : (1, 1, 128) f32   -- per-volume partial sum (written at last k).
    acc_ref  : (1, H*W) f32 scratch -- per-lane running sum for this volume.
    prev_ref : (1, H*W) f32 scratch -- last D-slab of the previous block (carry).
    mask_ref : (1, H*W) f32 scratch -- {0,1} interior mask (h >= 1 and w >= 1).
    """
    k = pl.program_id(1)
    last = pl.num_programs(1) - 1

    @pl.when(k == 0)
    def _prologue():
        # Build the flattened-(H,W) interior mask once per volume (no DMA stream).
        lane = jax.lax.broadcasted_iota(jnp.int32, (1, hw), 1)
        mask_ref[...] = ((lane % width != 0) & (lane >= width)).astype(jnp.float32)

    x = x_ref[0].astype(jnp.float32)           # upcast after DMA (native HBM traffic)
    m = mask_ref[...]

    # ---- Centers at local rows 1..block_d-1: the D-predecessor is in-tile ----
    xc = x[1:]                                 # (block_d-1, HW)
    dy = xc - x[:-1]                           # diff along D
    dx = xc - pltpu.roll(xc, width, axis=1)    # diff along H (lane roll by W)
    dz = xc - pltpu.roll(xc, 1, axis=1)        # diff along W (lane roll by 1)
    s = jnp.sqrt(dx * dx + dy * dy + dz * dz + 1e-6) * m
    part = jnp.sum(s, axis=0, keepdims=True)   # XLU sublane reduce -> (1, HW)

    @pl.when(k == 0)
    def _acc_init():                           # global d == 0 is not interior,
        acc_ref[...] = part                    # and rows 1.. are all valid here.

    if ragged:                                 # ragged => n_dt >= 2 => last >= 1
        @pl.when(jnp.logical_and(k > 0, k < last))
        def _acc_mid():                        # hot path: no D mask at all
            acc_ref[...] += part

        @pl.when(k == last)                    # only the last block pays the mask
        def _acc_last():
            row = jax.lax.broadcasted_iota(jnp.int32, s.shape, 0)
            valid = (k * block_d + 1 + row) < depth
            acc_ref[...] += jnp.sum(jnp.where(valid, s, 0.0), axis=0, keepdims=True)
    else:
        @pl.when(k > 0)
        def _acc_hot():
            acc_ref[...] += part

    # ---- Center at local row 0 (global d = k*block_d > 0): predecessor is the
    # carried last slab of the previous D-block.  (1, HW) work only. ----
    @pl.when(k > 0)
    def _row0():
        x0 = x[0:1]
        dy0 = x0 - prev_ref[...]
        dx0 = x0 - pltpu.roll(x0, width, axis=1)
        dz0 = x0 - pltpu.roll(x0, 1, axis=1)
        acc_ref[...] += jnp.sqrt(dx0 * dx0 + dy0 * dy0 + dz0 * dz0 + 1e-6) * m

    # Carry this block's last slab for the next D-block of this volume
    # (never read when invalid: the next volume's k == 0 skips _row0).
    prev_ref[...] = x[block_d - 1:block_d]

    @pl.when(k == last)
    def _finish():
        o_ref[...] = jnp.broadcast_to(jnp.sum(acc_ref[...]), o_ref.shape)


def _vmem_capacity_bytes():
    try:
        cap = getattr(pltpu.get_tpu_info(), "vmem_capacity_bytes", None)
        if cap:
            return int(cap)
    except Exception:
        pass
    return 64 * 1024 * 1024            # conservative default (v7x per-TensorCore)


def _round_block_d(td, d, pack):
    """Clamp/round a D-block so the BlockSpec is legal (multiple of 8 or full D)."""
    td = max(1, min(int(td), d))
    if td >= d:
        return d
    td = (td // pack) * pack           # prefer the dtype's native sublane pack
    if td < 8:
        td = min(pack, d)
    return d if td >= d else td


def _choose_block_d(d, hw, itemsize, cap):
    """Largest D-block whose working set fits comfortably in scoped VMEM."""
    # Resident bytes per D-row: 2x double-buffered native-dtype input block plus
    # ~5 f32 full-block temporaries (x upcast, dx/dy/dz/s with some reuse).
    budget = min(cap // 2, 40 * 1024 * 1024)
    per_row = hw * (2 * itemsize + 5 * 4)
    pack = max(8, 32 // itemsize)
    return _round_block_d(budget // per_row, d, pack)


def grad3d_itv(y_pred, y_true=None, *, block_d=None):
    """Pallas implementation of Grad3DiTV.forward(y_pred, y_true)."""
    del y_true                         # unused by the reference forward (matches PyTorch)
    n, c, d, h, w = y_pred.shape
    if n * c == 0 or d < 2 or h < 2 or w < 2:
        # Empty interior voxel set -> torch.mean over an empty tensor is NaN.
        return jnp.array(jnp.nan, dtype=jnp.float32)

    nc, hw = n * c, h * w
    x = y_pred.reshape(nc, d, hw)      # free reshape; keep native dtype (DMA as-is)

    itemsize = jnp.dtype(y_pred.dtype).itemsize
    pack = max(8, 32 // itemsize)      # sublane pack: 8 f32 / 16 bf16 / 32 int8
    cap = _vmem_capacity_bytes()
    td = (_round_block_d(block_d, d, pack) if block_d is not None
          else _choose_block_d(d, hw, itemsize, cap))
    n_dt = pl.cdiv(d, td)
    ragged = (d % td) != 0

    interior = nc * (d - 1) * (h - 1) * (w - 1)
    inv_denom = 1.0 / (3.0 * float(interior))

    kernel = functools.partial(_grad3d_itv_kernel, block_d=td, depth=d,
                               width=w, hw=hw, ragged=ragged)

    cost = pl.CostEstimate(
        flops=10 * nc * d * hw,
        transcendentals=nc * d * hw,
        bytes_accessed=nc * d * hw * itemsize + nc * 128 * 4,
    )
    vmem_limit = int(max(32 * 1024 * 1024, min(cap * 3 // 4, 96 * 1024 * 1024)))

    partials = pl.pallas_call(
        kernel,
        out_shape=jax.ShapeDtypeStruct((nc, 1, 128), jnp.float32),
        grid_spec=pltpu.PrefetchScalarGridSpec(
            num_scalar_prefetch=0,
            grid=(nc, n_dt),
            in_specs=[pl.BlockSpec((1, td, hw), lambda i, k: (i, k, 0))],
            out_specs=pl.BlockSpec((1, 1, 128), lambda i, k: (i, 0, 0)),
            scratch_shapes=[
                pltpu.VMEM((1, hw), jnp.float32),   # lane accumulator
                pltpu.VMEM((1, hw), jnp.float32),   # carried previous D-slab
                pltpu.VMEM((1, hw), jnp.float32),   # interior (h>=1, w>=1) mask
            ],
        ),
        compiler_params=pltpu.CompilerParams(
            dimension_semantics=("parallel", "arbitrary"),
            vmem_limit_bytes=vmem_limit,
        ),
        cost_estimate=cost,
    )(x)

    total = jnp.sum(partials[:, 0, 0])
    return total * jnp.float32(inv_denom)


def _grad3d_itv_ref(y_pred):
    """Pure-JAX reference mirroring the PyTorch forward."""
    p = y_pred.astype(jnp.float32)
    center = p[:, :, 1:, 1:, 1:]
    dy = jnp.abs(center - p[:, :, :-1, 1:, 1:])
    dx = jnp.abs(center - p[:, :, 1:, :-1, 1:])
    dz = jnp.abs(center - p[:, :, 1:, 1:, :-1])
    dd = jnp.mean(jnp.sqrt(dx * dx + dy * dy + dz * dz + 1e-6))
    return dd / 3.0


if __name__ == "__main__":
    key = jax.random.PRNGKey(0)
    k1, k2, k3, k4 = jax.random.split(key, 4)

    def _check(yp, yt=None, block_d=None, rtol=1e-4, atol=1e-5):
        out = jax.block_until_ready(grad3d_itv(yp, yt, block_d=block_d))
        ref = jax.block_until_ready(_grad3d_itv_ref(yp))
        assert jnp.allclose(out, ref, rtol=rtol, atol=atol), (out, ref)

    # 1) Base case: batch=2, channels=3, D=6, H=8, W=16 (single D-block).
    y_pred = jax.random.normal(k1, (2, 3, 6, 8, 16), dtype=jnp.float32)
    y_true = jax.random.normal(k2, (2, 3, 6, 8, 16), dtype=jnp.float32)
    _check(y_pred, y_true)

    # 2) Multi D-block path (carried slab across D-tiles).
    _check(jax.random.normal(k3, (1, 2, 16, 8, 16), dtype=jnp.float32), block_d=8)

    # 3) Ragged last D-block (D not divisible by block_d) -> masked select path.
    _check(jax.random.normal(k4, (1, 1, 12, 8, 16), dtype=jnp.float32), block_d=8)

    # 4) Native low-precision input (no wrapper upcast; cast happens in-kernel).
    _check(y_pred.astype(jnp.bfloat16), rtol=1e-3, atol=1e-4)

    print("KERNEL_OK")
</pallas_src>

<mosaic_0001>
module attributes {stable_mosaic.version = 11 : i64} {
  func.func @_grad3d_itv_kernel(%arg0: i32, %arg1: i32, %arg2: memref<1x6x128xf32, #tpu.memory_space<vmem>>, %arg3: memref<1x1x128xf32, #tpu.memory_space<vmem>>, %arg4: memref<1x128xf32, #tpu.memory_space<vmem>>, %arg5: memref<1x128xf32, #tpu.memory_space<vmem>>, %arg6: memref<1x128xf32, #tpu.memory_space<vmem>>) attributes {dimension_semantics = [#tpu.dimension_semantics<parallel>, #tpu.dimension_semantics<arbitrary>], iteration_bounds = array<i64: 6, 1>, scalar_prefetch = 0 : i64, scratch_operands = 3 : i64, tpu.core_type = #tpu.core_type<tc>, window_params = [{transform_indices = @transform_0, window_bounds = array<i64: 1, 6, 128>}, {transform_indices = @transform_1, window_bounds = array<i64: 1, 1, 128>}]} {
    %c0_i32 = arith.constant 0 : i32
    %0 = arith.cmpi eq, %arg1, %c0_i32 : i32
    %1 = arith.extui %0 : i1 to i32
    %c0_i32_0 = arith.constant 0 : i32
    %2 = arith.cmpi ne, %1, %c0_i32_0 : i32
    scf.if %2 {
      %39 = tpu.iota {dimensions = array<i32: 1>} : vector<1x128xi32>
      %c16_i32_16 = arith.constant 16 : i32
      %c0_i32_17 = arith.constant 0 : i32
      %40 = arith.cmpi eq, %c16_i32_16, %c0_i32_17 : i32
      %c1_i32_18 = arith.constant 1 : i32
      %41 = arith.select %40, %c1_i32_18, %c16_i32_16 : i32
      %42 = vector.broadcast %41 : i32 to vector<1x128xi32>
      %43 = arith.remsi %39, %42 : vector<1x128xi32>
      %c0_i32_19 = arith.constant 0 : i32
      %44 = vector.broadcast %c0_i32_19 : i32 to vector<1x128xi32>
      %45 = arith.cmpi ne, %43, %44 : vector<1x128xi32>
      %c0_i32_20 = arith.constant 0 : i32
      %46 = vector.broadcast %c0_i32_20 : i32 to vector<1x128xi32>
      %47 = arith.cmpi slt, %43, %46 : vector<1x128xi32>
      %c0_i32_21 = arith.constant 0 : i32
      %48 = arith.cmpi slt, %41, %c0_i32_21 : i32
      %49 = vector.broadcast %48 : i1 to vector<1x128xi1>
      %50 = vector.broadcast %49 : vector<1x128xi1> to vector<1x128xi1>
      %51 = arith.xori %47, %50 : vector<1x128xi1>
      %52 = arith.andi %51, %45 : vector<1x128xi1>
      %53 = vector.broadcast %41 : i32 to vector<1x128xi32>
      %54 = arith.addi %43, %53 : vector<1x128xi32>
      %55 = arith.select %52, %54, %43 : vector<1x128xi1>, vector<1x128xi32>
      %c0_i32_22 = arith.constant 0 : i32
      %56 = vector.broadcast %c0_i32_22 : i32 to vector<1x128xi32>
      %57 = arith.cmpi ne, %55, %56 : vector<1x128xi32>
      %c16_i32_23 = arith.constant 16 : i32
      %58 = vector.broadcast %c16_i32_23 : i32 to vector<1x128xi32>
      %59 = arith.cmpi sge, %39, %58 : vector<1x128xi32>
      %60 = arith.andi %57, %59 : vector<1x128xi1>
      %61 = arith.extui %60 : vector<1x128xi1> to vector<1x128xi32>
      %62 = arith.sitofp %61 : vector<1x128xi32> to vector<1x128xf32>
      %c0_24 = arith.constant 0 : index
      %c0_25 = arith.constant 0 : index
      %63 = vector.load %arg6[%c0_24, %c0_25] : memref<1x128xf32, #tpu.memory_space<vmem>>, vector<1x128xf32>
      tpu.vector_store %arg6[%c0_24, %c0_25], %62 {strides = array<i32>} : memref<1x128xf32, #tpu.memory_space<vmem>>, vector<1x128xf32>,
    } else {
    }
    %c0 = arith.constant 0 : index
    %c0_1 = arith.constant 0 : index
    %c0_2 = arith.constant 0 : index
    %3 = vector.load %arg2[%c0, %c0_1, %c0_2] : memref<1x6x128xf32, #tpu.memory_space<vmem>>, vector<1x6x128xf32>
    %4 = vector.shape_cast %3 : vector<1x6x128xf32> to vector<6x128xf32>
    %c0_3 = arith.constant 0 : index
    %c0_4 = arith.constant 0 : index
    %5 = vector.load %arg6[%c0_3, %c0_4] : memref<1x128xf32, #tpu.memory_space<vmem>>, vector<1x128xf32>
    %6 = vector.extract_strided_slice %4 {offsets = [1, 0], sizes = [5, 128], strides = [1, 1]} : vector<6x128xf32> to vector<5x128xf32>
    %7 = vector.extract_strided_slice %4 {offsets = [0, 0], sizes = [5, 128], strides = [1, 1]} : vector<6x128xf32> to vector<5x128xf32>
    %8 = arith.subf %6, %7 : vector<5x128xf32>
    %c16_i32 = arith.constant 16 : i32
    %9 = tpu.dynamic_rotate %6 by %c16_i32 dim 1 : vector<5x128xf32>, i32 -> vector<5x128xf32>
    %10 = arith.subf %6, %9 : vector<5x128xf32>
    %c1_i32 = arith.constant 1 : i32
    %11 = tpu.dynamic_rotate %6 by %c1_i32 dim 1 : vector<5x128xf32>, i32 -> vector<5x128xf32>
    %12 = arith.subf %6, %11 : vector<5x128xf32>
    %13 = arith.mulf %10, %10 : vector<5x128xf32>
    %14 = arith.mulf %8, %8 : vector<5x128xf32>
    %15 = arith.addf %13, %14 : vector<5x128xf32>
    %16 = arith.mulf %12, %12 : vector<5x128xf32>
    %17 = arith.addf %15, %16 : vector<5x128xf32>
    %cst = arith.constant 9.99999997E-7 : f32
    %18 = vector.broadcast %cst : f32 to vector<5x128xf32>
    %19 = arith.addf %17, %18 : vector<5x128xf32>
    %20 = math.sqrt %19 : vector<5x128xf32>
    %21 = vector.broadcast %5 : vector<1x128xf32> to vector<5x128xf32>
    %22 = arith.mulf %20, %21 : vector<5x128xf32>
    %cst_5 = arith.constant dense<0.000000e+00> : vector<128xf32>
    %23 = vector.multi_reduction <add>, %22, %cst_5 [0] : vector<5x128xf32> to vector<128xf32>
    %24 = vector.shape_cast %23 : vector<128xf32> to vector<1x128xf32>
    %c0_i32_6 = arith.constant 0 : i32
    %25 = arith.cmpi eq, %arg1, %c0_i32_6 : i32
    %26 = arith.extui %25 : i1 to i32
    %c0_i32_7 = arith.constant 0 : i32
    %27 = arith.cmpi ne, %26, %c0_i32_7 : i32
    scf.if %27 {
      %c0_16 = arith.constant 0 : index
      %c0_17 = arith.constant 0 : index
      %39 = vector.load %arg4[%c0_16, %c0_17] : memref<1x128xf32, #tpu.memory_space<vmem>>, vector<1x128xf32>
      tpu.vector_store %arg4[%c0_16, %c0_17], %24 {strides = array<i32>} : memref<1x128xf32, #tpu.memory_space<vmem>>, vector<1x128xf32>,
    } else {
    }
    %c0_i32_8 = arith.constant 0 : i32
    %28 = arith.cmpi sgt, %arg1, %c0_i32_8 : i32
    %29 = arith.extui %28 : i1 to i32
    %c0_i32_9 = arith.constant 0 : i32
    %30 = arith.cmpi ne, %29, %c0_i32_9 : i32
    scf.if %30 {
      %c0_16 = arith.constant 0 : index
      %c0_17 = arith.constant 0 : index
      %39 = vector.load %arg4[%c0_16, %c0_17] : memref<1x128xf32, #tpu.memory_space<vmem>>, vector<1x128xf32>
      %40 = arith.addf %39, %24 : vector<1x128xf32>
      %c0_18 = arith.constant 0 : index
      %c0_19 = arith.constant 0 : index
      %41 = vector.load %arg4[%c0_18, %c0_19] : memref<1x128xf32, #tpu.memory_space<vmem>>, vector<1x128xf32>
      tpu.vector_store %arg4[%c0_18, %c0_19], %40 {strides = array<i32>} : memref<1x128xf32, #tpu.memory_space<vmem>>, vector<1x128xf32>,
    } else {
    }
    %c0_i32_10 = arith.constant 0 : i32
    %31 = arith.cmpi sgt, %arg1, %c0_i32_10 : i32
    %32 = arith.extui %31 : i1 to i32
    %c0_i32_11 = arith.constant 0 : i32
    %33 = arith.cmpi ne, %32, %c0_i32_11 : i32
    scf.if %33 {
      %39 = vector.extract_strided_slice %4 {offsets = [0, 0], sizes = [1, 128], strides = [1, 1]} : vector<6x128xf32> to vector<1x128xf32>
      %c0_16 = arith.constant 0 : index
      %c0_17 = arith.constant 0 : index
      %40 = vector.load %arg5[%c0_16, %c0_17] : memref<1x128xf32, #tpu.memory_space<vmem>>, vector<1x128xf32>
      %41 = arith.subf %39, %40 : vector<1x128xf32>
      %c16_i32_18 = arith.constant 16 : i32
      %42 = tpu.dynamic_rotate %39 by %c16_i32_18 dim 1 : vector<1x128xf32>, i32 -> vector<1x128xf32>
      %43 = arith.subf %39, %42 : vector<1x128xf32>
      %c1_i32_19 = arith.constant 1 : i32
      %44 = tpu.dynamic_rotate %39 by %c1_i32_19 dim 1 : vector<1x128xf32>, i32 -> vector<1x128xf32>
      %45 = arith.subf %39, %44 : vector<1x128xf32>
      %c0_20 = arith.constant 0 : index
      %c0_21 = arith.constant 0 : index
      %46 = vector.load %arg4[%c0_20, %c0_21] : memref<1x128xf32, #tpu.memory_space<vmem>>, vector<1x128xf32>
      %47 = arith.mulf %43, %43 : vector<1x128xf32>
      %48 = arith.mulf %41, %41 : vector<1x128xf32>
      %49 = arith.addf %47, %48 : vector<1x128xf32>
      %50 = arith.mulf %45, %45 : vector<1x128xf32>
      %51 = arith.addf %49, %50 : vector<1x128xf32>
      %cst_22 = arith.constant 9.99999997E-7 : f32
      %52 = vector.broadcast %cst_22 : f32 to vector<1x128xf32>
      %53 = arith.addf %51, %52 : vector<1x128xf32>
      %54 = math.sqrt %53 : vector<1x128xf32>
      %55 = arith.mulf %54, %5 : vector<1x128xf32>
      %56 = arith.addf %46, %55 : vector<1x128xf32>
      %c0_23 = arith.constant 0 : index
      %c0_24 = arith.constant 0 : index
      %57 = vector.load %arg4[%c0_23, %c0_24] : memref<1x128xf32, #tpu.memory_space<vmem>>, vector<1x128xf32>
      tpu.vector_store %arg4[%c0_23, %c0_24], %56 {strides = array<i32>} : memref<1x128xf32, #tpu.memory_space<vmem>>, vector<1x128xf32>,
    } else {
    }
    %34 = vector.extract_strided_slice %4 {offsets = [5, 0], sizes = [1, 128], strides = [1, 1]} : vector<6x128xf32> to vector<1x128xf32>
    %c0_12 = arith.constant 0 : index
    %c0_13 = arith.constant 0 : index
    %35 = vector.load %arg5[%c0_12, %c0_13] : memref<1x128xf32, #tpu.memory_space<vmem>>, vector<1x128xf32>
    tpu.vector_store %arg5[%c0_12, %c0_13], %34 {strides = array<i32>} : memref<1x128xf32, #tpu.memory_space<vmem>>, vector<1x128xf32>,
    %c0_i32_14 = arith.constant 0 : i32
    %36 = arith.cmpi eq, %arg1, %c0_i32_14 : i32
    %37 = arith.extui %36 : i1 to i32
    %c0_i32_15 = arith.constant 0 : i32
    %38 = arith.cmpi ne, %37, %c0_i32_15 : i32
    scf.if %38 {
      %c0_16 = arith.constant 0 : index
      %c0_17 = arith.constant 0 : index
      %39 = vector.load %arg4[%c0_16, %c0_17] : memref<1x128xf32, #tpu.memory_space<vmem>>, vector<1x128xf32>
      %40 = vector.shape_cast %39 : vector<1x128xf32> to vector<1x1x128xf32>
      %cst_18 = arith.constant dense<0.000000e+00> : vector<1xf32>
      %41 = vector.multi_reduction <add>, %40, %cst_18 [1, 2] : vector<1x1x128xf32> to vector<1xf32>
      %42 = vector.shape_cast %41 : vector<1xf32> to vector<1x1x1xf32>
      %43 = vector.extract %42[0, 0, 0] : f32 from vector<1x1x1xf32>
      %44 = vector.broadcast %43 : f32 to vector<1x1x128xf32>
      %c0_19 = arith.constant 0 : index
      %c0_20 = arith.constant 0 : index
      %c0_21 = arith.constant 0 : index
      %45 = vector.load %arg3[%c0_19, %c0_20, %c0_21] : memref<1x1x128xf32, #tpu.memory_space<vmem>>, vector<1x1x128xf32>
      tpu.vector_store %arg3[%c0_19, %c0_20, %c0_21], %44 {strides = array<i32>} : memref<1x1x128xf32, #tpu.memory_space<vmem>>, vector<1x1x128xf32>,
    } else {
    }
    return
  }
  func.func @transform_0(%arg0: i32, %arg1: i32) -> (i32, i32, i32) {
    %c0_i32 = arith.constant 0 : i32
    %c0_i32_0 = arith.constant 0 : i32
    return %arg0, %arg1, %c0_i32 : i32, i32, i32
  }
  func.func @transform_1(%arg0: i32, %arg1: i32) -> (i32, i32, i32) {
    %c0_i32 = arith.constant 0 : i32
    %c0_i32_0 = arith.constant 0 : i32
    %c0_i32_1 = arith.constant 0 : i32
    return %arg0, %c0_i32, %c0_i32_0 : i32, i32, i32
  }
}

</mosaic_0001>

<llo_original>
// kernel: tpu_custom_call.1
$region0: #{tpu_custom_call.1}
  #allocation0 [shape = 'u32[]', space=smem, size = 0x4, offset = 0x4, fixed_abs, tag = 'smem constant byte address 0x4 - core index']
  #allocation1 [shape = 'u32[144,128]{1,0:T(1,128)}', space=vmem, size = 0x12000, scoped, tag = 'internal scratch']
  #allocation2 [shape = 'f32[1,128]{1,0:T(1,128)}', space=vmem, size = 0x200, scoped, tag = 'scratch operand']
  #allocation3 [shape = 'f32[1,128]{1,0:T(1,128)}', space=vmem, size = 0x200, scoped, tag = 'scratch operand']
  #allocation4 [shape = 'f32[1,128]{1,0:T(1,128)}', space=vmem, size = 0x200, scoped, tag = 'scratch operand']
  %s0 = inlined_call_operand.hbm [shape: f32[6,6,128], index: 0, kind: input, shape index: {}]
  %s1 = inlined_call_operand.hbm [shape: f32[6,1,128], index: 1, kind: output, shape index: {}]
  %s2 = sld [smem:[#allocation0]]
  $region57: #{tpu_custom_call.1} parent=0
    _
  %s4 = ssub.s32 1, %s2
  %s5 = scalar_select 0, %s4, %s2
  $region1: #{tpu_custom_call.1} parent=0
    #allocation5 [shape = 'u8[8192]{0}', space=vmem, size = 0x2000, scoped, tag = 'input window, operand 0']
    #allocation6 [shape = 's32[2]{0}', space=sflag, size = 0x8, scoped, tag = 'scoped memory for tpu_custom_call.1']
    #allocation7 [shape = 's32[2]{0}', space=sflag, size = 0x8, scoped, tag = 'scoped memory for tpu_custom_call.1']
    #allocation8 [shape = 'u8[1024]{0}', space=vmem, size = 0x400, scoped, tag = 'output window, operand 0']
    %6 = vsyncpa [#allocation6], 0
    %s7 = scalar_lea.sflag [#allocation6], 1
    %8 = vsyncpa %s7, 0
    %9 = vsyncpa [#allocation7], 0
    %s10 = scalar_lea.sflag [#allocation7], 1
    %11 = vsyncpa %s10, 0
    loop: start=0, step=1, limit=8
    $region2: #{tpu_custom_call.1} parent=1 // loop_pre_header
      _
    $region3: #{tpu_custom_call.1} parent=1 // loop_header
      %s13 = sphi 0, %s17
      %p14 = scmp.ge.s32.totalorder %s13, 8
      %s20 = sphi 0, %s32
      %s21 = sphi 0, %s28
      %s22 = sphi 0, %s20
      %s23 = sphi 0, %s21
      %s24 = sphi 0, %s22
      %s25 = sphi 0, %s23
      %s37 = sphi 0, %s39
      %s40 = sphi 0, %s37
      %s41 = sphi 0, %s40
      %s57 = sphi 0, %s41
      %s63 = sphi 0, %s65
      %s66 = sphi 0, %s63
      %s67 = sphi 0, %s66
      %s83 = sphi 0, %s67
    $region4: #{tpu_custom_call.1} parent=1 // loop_header_branch
      %16 = sbr.rel (%p14) target = $region8
    $region5: #{tpu_custom_call.1} parent=1 // loop_body
      %s18 = ssub.s32 %s13, 1
      %s19 = ssub.s32 %s13, 2
      %s26 = sadd.s32 1, %s21
      %p27 = scmp.ge.s32.totalorder %s26, 1
      %s28 = scalar_select %p27, 0, %s26
      %s29 = sadd.s32 1, %s20
      %s30 = scalar_select %p27, %s29, %s20
      %p31 = scmp.ge.s32.totalorder %s30, 6
      %s32 = scalar_select %p31, 0, %s30
      %s33 = ssub.s32 %s20, %s32
      %s34 = ssub.s32 %s21, %s28
      %s35 = sor.u32 %s33, %s34
      %p36 = scmp.eq.s32.totalorder %s35, 0
      %s38 = sadd.s32 %s37, 1
      %s39 = scalar_select %p36, %s37, %s38
      %p42 = pneg %p36
      %p43 = scmp.eq.s32.totalorder %s13, 5
      %p44 = por %p42, %p43
      %p45 = scmp.ne.s32.totalorder %s37, %s40
      %p46 = scmp.eq.s32.totalorder %s13, 0
      %p47 = por %p45, %p46
      %p48 = scmp.ne.s32.totalorder %s37, %s40
      %p49 = scmp.eq.s32.totalorder %s18, 5
      %p50 = por %p48, %p49
      %p51 = scmp.ne.s32.totalorder %s40, %s41
      %p52 = scmp.eq.s32.totalorder %s18, 0
      %p53 = por %p51, %p52
      %p54 = scmp.ne.s32.totalorder %s40, %s41
      %p55 = scmp.eq.s32.totalorder %s19, 5
      %p56 = por %p54, %p55
      %p58 = scmp.ne.s32.totalorder %s41, %s57
      %p59 = scmp.eq.s32.totalorder %s19, 0
      %p60 = por %p58, %p59
      %s61 = ssub.s32 %s20, %s32
      %p62 = scmp.eq.s32.totalorder %s61, 0
      %s64 = sadd.s32 %s63, 1
      %s65 = scalar_select %p62, %s63, %s64
      %p68 = pneg %p62
      %p69 = scmp.eq.s32.totalorder %s13, 5
      %p70 = por %p68, %p69
      %p71 = scmp.ne.s32.totalorder %s63, %s66
      %p72 = scmp.eq.s32.totalorder %s13, 0
      %p73 = por %p71, %p72
      %p74 = scmp.ne.s32.totalorder %s63, %s66
      %p75 = scmp.eq.s32.totalorder %s18, 5
      %p76 = por %p74, %p75
      %p77 = scmp.ne.s32.totalorder %s66, %s67
      %p78 = scmp.eq.s32.totalorder %s18, 0
      %p79 = por %p77, %p78
      %p80 = scmp.ne.s32.totalorder %s66, %s67
      %p81 = scmp.eq.s32.totalorder %s19, 5
      %p82 = por %p80, %p81
      %p84 = scmp.ne.s32.totalorder %s67, %s83
      %p85 = scmp.eq.s32.totalorder %s19, 0
      %p86 = por %p84, %p85
      %p87 = scmp.le.s32.totalorder 1, %s13
      %p88 = scmp.lt.s32.totalorder %s13, 7
      %p89 = pnand %p87, %p88
      %p90 = pneg %p89
      // Predicated region
      $region9: #{tpu_custom_call.1} parent=5 // pred_check
        _
      $region10: #{tpu_custom_call.1} parent=5 // pred_check_branch
        %92 = sbr.rel (%p89) target = $region12
      $region11: #{tpu_custom_call.1} parent=5 // pred_region
        %s93 = ssub.s32 %s13, 1
      $region12: #{tpu_custom_call.1} parent=5 // pred_fallthru
        _
      %p94 = scmp.lt.s32.totalorder %s13, 6
      // Predicated region
      $region13: #{tpu_custom_call.1} parent=5 // pred_check
        %p95 = pneg %p94
      $region14: #{tpu_custom_call.1} parent=5 // pred_check_branch
        %97 = sbr.rel (%p95) target = $region16
      $region15: #{tpu_custom_call.1} parent=5 // pred_region
        // Predicated region
        $region17: #{tpu_custom_call.1} parent=15 // pred_check
          %p98 = pneg %p47
        $region18: #{tpu_custom_call.1} parent=15 // pred_check_branch
          %100 = sbr.rel (%p98) target = $region20
        $region19: #{tpu_custom_call.1} parent=15 // pred_region
          %s101 = sand.u32 %s37, 1
          %s102 = scalar_lea.sflag [#allocation6], %s101
          %s103 = sand.u32 %s37, 1
          %s104 = smul.addr %s103, 8
          %s105 = scalar_lea.vmem [#allocation5], %s104
          %s107 = ssub.s32 128, 128
          %108 = vsyncadd %s102, %s107
          %s109 = sadd.s32 %s21, %s20
          %s110 = smul.addr %s109, 128
          %s111 = scalar_lea.hbm %s0, %s110
          %s113 = sshll.u32 %s105, 4
          %s114 = int_to_ptr.vmem [resolvable:$true] %s113
          %116 = dma.hbm_to_vmem [thread:$0]  %s111, 128, %s114, %s102
        $region20: #{tpu_custom_call.1} parent=15 // pred_fallthru
          _
      $region16: #{tpu_custom_call.1} parent=5 // pred_fallthru
        _
      %p117 = scmp.le.s32.totalorder 1, %s13
      %p118 = scmp.lt.s32.totalorder %s13, 7
      %p119 = pnand %p117, %p118
      %p120 = pneg %p119
      // Predicated region
      $region21: #{tpu_custom_call.1} parent=5 // pred_check
        _
      $region22: #{tpu_custom_call.1} parent=5 // pred_check_branch
        %122 = sbr.rel (%p119) target = $region24
      $region23: #{tpu_custom_call.1} parent=5 // pred_region
        %s123 = ssub.s32 %s13, 1
        %s124 = sand.u32 %s40, 1
        %s125 = scalar_lea.sflag [#allocation6], %s124
        %s126 = sand.u32 %s40, 1
        %s127 = smul.addr %s126, 8
        %s128 = scalar_lea.vmem [#allocation5], %s127
        // Predicated region
        $region25: #{tpu_custom_call.1} parent=23 // pred_check
          %p129 = pneg %p53
        $region26: #{tpu_custom_call.1} parent=23 // pred_check_branch
          %131 = sbr.rel (%p129) target = $region28
        $region27: #{tpu_custom_call.1} parent=23 // pred_region
          %132 = dma.done %s125, 128
        $region28: #{tpu_custom_call.1} parent=23 // pred_fallthru
          _
        %s133 = sand.u32 %s40, 1
        %s134 = scalar_lea.sflag [#allocation6], %s133
        %s135 = sand.u32 %s40, 1
        %s136 = smul.addr %s135, 8
        %s137 = scalar_lea.vmem [#allocation5], %s136
        %p138 = pneg %p53
        %p139 = pneg %p50
        %p140 = pneg %p79
        %p141 = pneg %p76
        %s142 = sand.u32 %s66, 1
        %s143 = scalar_lea.sflag [#allocation7], %s142
        %s144 = sand.u32 %s66, 1
        %s145 = scalar_lea.vmem [#allocation8], %s144
        %p146 = scmp.eq.s32.totalorder %s23, 0
        // Predicated region
        $region29: #{tpu_custom_call.1} parent=23 // pred_check
          %p147 = pneg %p146
        $region30: #{tpu_custom_call.1} parent=23 // pred_check_branch
          %149 = sbr.rel (%p147) target = $region32
        $region31: #{tpu_custom_call.1} parent=23 // pred_region
          %v150 = vlaneseq
          %v151 = vand.u32 %v150, 127
          %vm152 = vcmp.lt.s32.totalorder %v151, 0
          %v153 = vsub.s32 0, %v151
          %v154 = vsel %vm152, %v153, %v151
          %v155 = vshrl.u32 %v154, 4
          %v156 = vand.u32 %v154, 15
          %v157 = vsub.s32 0, %v156
          %v158 = vsel %vm152, %v157, %v156
          %vm159 = vcmp.ne.s32.totalorder %v158, 0
          %vm160 = vcmp.lt.s32.totalorder %v158, 0
          %vm161 = vmand %vm160, %vm159
          %v162 = vadd.s32 %v158, 16
          %v163 = vsel %vm161, %v162, %v158
          %vm164 = vcmp.ne.s32.totalorder %v163, 0
          %vm165 = vcmp.ge.s32.totalorder %v151, 16
          %vm166 = vmand %vm164, %vm165
          %v167 = vsel %vm166, 1, 0
          %v168 = vcvt.s32.f32 %v167
          %169 = vst [vmem:[#allocation4] sm:$0x1] %v168
        $region32: #{tpu_custom_call.1} parent=23 // pred_fallthru
          _
        %v170 = vld [vmem:[%s128] sm:$0x3f]
        %v171 = vld [vmem:[#allocation4] sm:$0x1]
        %v173 = vrot.slane %v170, 7
        %v175 = vsub.f32 %v170, %v173
        %v176 = vrot.slane %v170, 1
        %178 = vrot.lane.b32.xlu0 %v176, 16
        %v179 = vpop.permute.xlu0 %178
        %v181 = vrot.slane %v179, 7
        %v183 = vsub.f32 %v170, %v181
        %184 = vrot.lane.b32.xlu0 %v176, 1
        %v185 = vpop.permute.xlu0 %184
        %v187 = vrot.slane %v185, 7
        %v189 = vsub.f32 %v170, %v187
        %v190 = vmul.f32 %v183, %v183
        %v191 = vmul.f32 %v175, %v175
        %v192 = vadd.f32 %v190, %v191
        %v193 = vmul.f32 %v189, %v189
        %v194 = vadd.f32 %v192, %v193
        %v195 = vadd.f32 %v194, 1e-06
        %v196 = vrsqrt.pop %v195
        %v197 = vmul.f32 %v195, %v196
        %vm198 = vcmp.eq.f32.partialorder %v195, inf
        %v199 = vsel %vm198, %v195, %v197
        %vm200 = vcmp.eq.f32.partialorder %v195, 0.0
        %v201 = vand.u32 %v195, 2147483648
        %v202 = vsel %vm200, %v201, %v199
        %v204 = vlaneseq
        %v205 = vshrl.u32 %v204, 7
        %v206 = vsub.s32 0, %v205
        %v207 = vrot.slane %v171, %v206
        %v209 = vmul.f32 %v202, %v207
        %v211 = vrot.slane %v209, 1
        %vm213 = vcmask 1044480
        %v214 = vsel %vm213, %v211, 0.0
        %v215 = vrot.slane %v214, 4
        %v216 = vadd.f32 %v214, %v215
        %v217 = vrot.slane %v216, 2
        %v218 = vadd.f32 %v216, %v217
        %v219 = vrot.slane %v218, 1
        %v220 = vadd.f32 %v218, %v219
        // Predicated region
        $region33: #{tpu_custom_call.1} parent=23 // pred_check
          %p221 = pneg %p146
        $region34: #{tpu_custom_call.1} parent=23 // pred_check_branch
          %223 = sbr.rel (%p221) target = $region36
        $region35: #{tpu_custom_call.1} parent=23 // pred_region
          %224 = vst [vmem:[#allocation2] sm:$0x1] %v220
        $region36: #{tpu_custom_call.1} parent=23 // pred_fallthru
          _
        %p225 = scmp.gt.s32.totalorder %s23, 0
        // Predicated region
        $region37: #{tpu_custom_call.1} parent=23 // pred_check
          %p226 = pneg %p225
        $region38: #{tpu_custom_call.1} parent=23 // pred_check_branch
          %228 = sbr.rel (%p226) target = $region40
        $region39: #{tpu_custom_call.1} parent=23 // pred_region
          %v229 = vld [vmem:[#allocation2] sm:$0x1]
          %v230 = vadd.f32 %v229, %v220
          %231 = vst [vmem:[#allocation2] sm:$0x1] %v230
          %v232 = vld [vmem:[#allocation3] sm:$0x1]
          %v233 = vsub.f32 %v170, %v232
          %234 = vrot.lane.b32.xlu0 %v170, 16
          %v235 = vpop.permute.xlu0 %234
          %v236 = vsub.f32 %v170, %v235
          %237 = vrot.lane.b32.xlu0 %v170, 1
          %v238 = vpop.permute.xlu0 %237
          %v239 = vsub.f32 %v170, %v238
          %v240 = vld [vmem:[#allocation2] sm:$0x1]
          %v241 = vmul.f32 %v236, %v236
          %v242 = vmul.f32 %v233, %v233
          %v243 = vadd.f32 %v241, %v242
          %v244 = vmul.f32 %v239, %v239
          %v245 = vadd.f32 %v243, %v244
          %v246 = vadd.f32 %v245, 1e-06
          %v247 = vrsqrt.pop %v246
          %v248 = vmul.f32 %v246, %v247
          %vm249 = vcmp.eq.f32.partialorder %v246, inf
          %v250 = vsel %vm249, %v246, %v248
          %vm251 = vcmp.eq.f32.partialorder %v246, 0.0
          %v252 = vand.u32 %v246, 2147483648
          %v253 = vsel %vm251, %v252, %v250
          %v254 = vmul.f32 %v253, %v171
          %v255 = vadd.f32 %v240, %v254
          %256 = vst [vmem:[#allocation2] sm:$0x1] %v255
        $region40: #{tpu_custom_call.1} parent=23 // pred_fallthru
          _
        %257 = vst [vmem:[#allocation3 - $0x5] sm:$0x20] %v170
        // Predicated region
        $region41: #{tpu_custom_call.1} parent=23 // pred_check
          %p258 = pneg %p146
        $region42: #{tpu_custom_call.1} parent=23 // pred_check_branch
          %260 = sbr.rel (%p258) target = $region44
        $region43: #{tpu_custom_call.1} parent=23 // pred_region
          %v261 = vld [vmem:[#allocation2] sm:$0x1]
          %vm262 = vcmask 1040384
          %v263 = vsel %vm262, %v261, 0.0
          %264 = vadd.xlane.f32.xlu0 %v263
          %v265 = vpop.xlane.xlu0 %264
          %v266 = vrot.slane %v265, 4
          %v267 = vadd.f32 %v265, %v266
          %v268 = vrot.slane %v267, 2
          %v269 = vadd.f32 %v267, %v268
          %v270 = vrot.slane %v269, 1
          %v271 = vadd.f32 %v269, %v270
          %s272 = vtos %v271
          %v273 = vstv %s272
          %274 = vst [vmem:[%s145] sm:$0x1] %v273
        $region44: #{tpu_custom_call.1} parent=23 // pred_fallthru
          _
        %s275 = sand.u32 %s66, 1
        %s276 = scalar_lea.sflag [#allocation7], %s275
        %s277 = sand.u32 %s66, 1
        %s278 = scalar_lea.vmem [#allocation8], %s277
        // Predicated region
        $region45: #{tpu_custom_call.1} parent=23 // pred_check
          %p279 = pneg %p76
        $region46: #{tpu_custom_call.1} parent=23 // pred_check_branch
          %281 = sbr.rel (%p279) target = $region48
        $region47: #{tpu_custom_call.1} parent=23 // pred_region
          %s283 = ssub.s32 16, 16
          %284 = vsyncadd %s276, %s283
          %s285 = smul.addr %s22, 16
          %s286 = scalar_lea.hbm %s1, %s285
          %s288 = sshll.u32 %s278, 4
          %s289 = int_to_ptr.vmem [resolvable:$true] %s288
          %291 = dma.vmem_to_hbm [thread:$0]  %s289, 16, %s286, %s276
        $region48: #{tpu_custom_call.1} parent=23 // pred_fallthru
          _
      $region24: #{tpu_custom_call.1} parent=5 // pred_fallthru
        _
      %p292 = scmp.le.s32.totalorder 2, %s13
      // Predicated region
      $region49: #{tpu_custom_call.1} parent=5 // pred_check
        %p293 = pneg %p292
      $region50: #{tpu_custom_call.1} parent=5 // pred_check_branch
        %295 = sbr.rel (%p293) target = $region52
      $region51: #{tpu_custom_call.1} parent=5 // pred_region
        %s296 = ssub.s32 %s13, 2
        // Predicated region
        $region53: #{tpu_custom_call.1} parent=51 // pred_check
          %p297 = pneg %p82
        $region54: #{tpu_custom_call.1} parent=51 // pred_check_branch
          %299 = sbr.rel (%p297) target = $region56
        $region55: #{tpu_custom_call.1} parent=51 // pred_region
          %s300 = sand.u32 %s67, 1
          %s301 = scalar_lea.sflag [#allocation7], %s300
          %s302 = sand.u32 %s67, 1
          %s303 = scalar_lea.vmem [#allocation8], %s302
          %304 = dma.done %s301, 16
        $region56: #{tpu_custom_call.1} parent=51 // pred_fallthru
          _
      $region52: #{tpu_custom_call.1} parent=5 // pred_fallthru
        _
    $region6: #{tpu_custom_call.1} parent=1 // loop_footer
      %s17 = sadd.s32 1, %s13
    $region7: #{tpu_custom_call.1} parent=1 // loop_footer_branch
      %12 = sbr.rel target = $region3
    $region8: #{tpu_custom_call.1} parent=1 // loop_exit
      _
    %305 = vsyncpa [#allocation6], 1
    %s306 = scalar_lea.sflag [#allocation6], 1
    %307 = vsyncpa %s306, 1
    %308 = vsyncpa [#allocation7], 1
    %s309 = scalar_lea.sflag [#allocation7], 1
    %310 = vsyncpa %s309, 1

</llo_original>
